<compile_context>
chip_gen: v6e
topology: v6e:2x2x1
jax: 0.10.0
libtpu: 0.0.40
codegen_flags: <defaults>
</compile_context>

<pallas_src>
import jax
import jax.numpy as jnp
from jax.experimental import pallas as pl
from jax.experimental.pallas import tpu as pltpu

EPS = 1e-5
K_IN = 32      # decoder input width
N_OUT = 561    # decoder output width (written directly, no lane padding)


def decoder_kernel(x_ref, w_ref, b_ref, o_ref):
    # Single collapsed affine map: (tile_b, 32) @ (32, 561) + (1, 561)
    o_ref[...] = (
        jnp.dot(x_ref[...], w_ref[...], preferred_element_type=jnp.float32)
        + b_ref[...]
    )


def _fold_bn(gamma, beta, mean, var):
    scale = gamma / jnp.sqrt(var + EPS)
    shift = beta - mean * scale
    return scale, shift


def _collapse_params(params):
    """Collapse BN->Dropout(eval)->Linear x3 into one (W_eff, b_eff)."""
    s1, h1 = _fold_bn(*params["bn1"])
    s2, h2 = _fold_bn(*params["bn2"])
    s3, h3 = _fold_bn(*params["bn3"])

    a1 = s1[:, None] * params["w1"]
    c1 = h1 @ params["w1"] + params["b1"]
    a2 = s2[:, None] * params["w2"]
    c2 = h2 @ params["w2"] + params["b2"]
    a3 = s3[:, None] * params["w3"]
    c3 = h3 @ params["w3"] + params["b3"]

    w_eff = a1 @ a2 @ a3                       # (32, 561)
    b_eff = (c1 @ a2 + c2) @ a3 + c3           # (561,)
    return w_eff.astype(jnp.float32), b_eff.reshape(1, N_OUT).astype(jnp.float32)


def _pick_tile_b(B, cap):
    """Sublane-aligned batch tile; >=2 tiles when possible (v7x megacore)."""
    cap = max(8, (cap // 8) * 8)
    tile_b = min(cap, ((B + 7) // 8) * 8)
    if B > 8:
        # Cap at ~half the batch (rounded up to 8) so the parallel grid has
        # at least two steps -> both v7x TensorCores run; no-op on v5e/v6e.
        half = ((-(-B // 2) + 7) // 8) * 8
        tile_b = min(tile_b, half)
    return max(8, tile_b)


def nn_decoder_forward(x, params, *, tile_b=2048):
    """x: (B, 32) float32.  Returns (B, 561) float32 (eval-mode forward)."""
    B = x.shape[0]
    w_eff, b_eff = _collapse_params(params)

    tb = _pick_tile_b(B, tile_b)
    n_tiles = pl.cdiv(B, tb)   # ragged last block handled by Pallas (masked)

    flops = 2 * B * K_IN * N_OUT
    bytes_accessed = 4 * (B * K_IN + K_IN * N_OUT + N_OUT + B * N_OUT)

    return pl.pallas_call(
        decoder_kernel,
        out_shape=jax.ShapeDtypeStruct((B, N_OUT), jnp.float32),
        grid=(n_tiles,),
        in_specs=[
            pl.BlockSpec((tb, K_IN), lambda i: (i, 0)),    # x tile, pipelined
            pl.BlockSpec((K_IN, N_OUT), lambda i: (0, 0)),  # W_eff, VMEM-resident
            pl.BlockSpec((1, N_OUT), lambda i: (0, 0)),     # b_eff, VMEM-resident
        ],
        out_specs=pl.BlockSpec((tb, N_OUT), lambda i: (i, 0)),
        compiler_params=pltpu.CompilerParams(
            dimension_semantics=("parallel",),   # shard batch tiles across TCs on v7x
            vmem_limit_bytes=48 << 20,           # headroom under v7x's 64 MiB VMEM
        ),
        cost_estimate=pl.CostEstimate(
            flops=flops, bytes_accessed=bytes_accessed, transcendentals=0),
    )(x, w_eff, b_eff)


def reference_forward(x, params):
    """Plain-JAX eval-mode reference (layer by layer, unfused)."""
    s1, h1 = _fold_bn(*params["bn1"])
    s2, h2 = _fold_bn(*params["bn2"])
    s3, h3 = _fold_bn(*params["bn3"])
    h = x * s1 + h1
    h = h @ params["w1"] + params["b1"]
    h = h * s2 + h2
    h = h @ params["w2"] + params["b2"]
    h = h * s3 + h3
    return h @ params["w3"] + params["b3"]


def init_params(key):
    ks = jax.random.split(key, 6)

    def bn(c, k):
        k1, k2, k3, k4 = jax.random.split(k, 4)
        gamma = 1.0 + 0.1 * jax.random.normal(k1, (c,), jnp.float32)
        beta = 0.1 * jax.random.normal(k2, (c,), jnp.float32)
        mean = 0.05 * jax.random.normal(k3, (c,), jnp.float32)
        var = jnp.abs(1.0 + 0.1 * jax.random.normal(k4, (c,), jnp.float32))
        return gamma, beta, mean, var

    def linear(cin, cout, k):
        k1, k2 = jax.random.split(k)
        bound = 1.0 / jnp.sqrt(cin)
        w = jax.random.uniform(k1, (cin, cout), jnp.float32, -bound, bound)
        b = jax.random.uniform(k2, (cout,), jnp.float32, -bound, bound)
        return w, b

    w1, b1 = linear(32, 64, ks[0])
    w2, b2 = linear(64, 256, ks[1])
    w3, b3 = linear(256, 561, ks[2])
    return {
        "bn1": bn(32, ks[3]), "bn2": bn(64, ks[4]), "bn3": bn(256, ks[5]),
        "w1": w1, "b1": b1, "w2": w2, "b2": b2, "w3": w3, "b3": b3,
    }


if __name__ == "__main__":
    key = jax.random.PRNGKey(0)
    kx, kx2, kp = jax.random.split(key, 3)
    params = init_params(kp)

    # Case 1: tile-aligned batch.
    B1 = 8
    x1 = jax.random.normal(kx, (B1, K_IN), jnp.float32)
    out1 = jax.block_until_ready(nn_decoder_forward(x1, params))
    assert out1.shape == (B1, N_OUT), out1.shape
    ref1 = reference_forward(x1, params)
    assert jnp.allclose(out1, ref1, atol=1e-3, rtol=1e-3), float(
        jnp.max(jnp.abs(out1 - ref1)))

    # Case 2: ragged batch (exercises non-divisible grid + >=2 parallel tiles).
    B2 = 10
    x2 = jax.random.normal(kx2, (B2, K_IN), jnp.float32)
    out2 = jax.block_until_ready(nn_decoder_forward(x2, params))
    assert out2.shape == (B2, N_OUT), out2.shape
    ref2 = reference_forward(x2, params)
    assert jnp.allclose(out2, ref2, atol=1e-3, rtol=1e-3), float(
        jnp.max(jnp.abs(out2 - ref2)))

    print("KERNEL_OK")
</pallas_src>

<mosaic_0001>
module attributes {stable_mosaic.version = 11 : i64} {
  func.func @decoder_kernel(%arg0: i32, %arg1: memref<8x32xf32, #tpu.memory_space<vmem>>, %arg2: memref<32x561xf32, #tpu.memory_space<vmem>>, %arg3: memref<1x561xf32, #tpu.memory_space<vmem>>, %arg4: memref<8x561xf32, #tpu.memory_space<vmem>>) attributes {dimension_semantics = [#tpu.dimension_semantics<parallel>], iteration_bounds = array<i64: 1>, scalar_prefetch = 0 : i64, scratch_operands = 0 : i64, tpu.core_type = #tpu.core_type<tc>, window_params = [{transform_indices = @transform_0, window_bounds = array<i64: 8, 32>}, {pipeline_mode = #tpu.pipeline_mode<synchronous>, transform_indices = @transform_1, window_bounds = array<i64: 32, 561>}, {pipeline_mode = #tpu.pipeline_mode<synchronous>, transform_indices = @transform_2, window_bounds = array<i64: 1, 561>}, {transform_indices = @transform_3, window_bounds = array<i64: 8, 561>}]} {
    %c0 = arith.constant 0 : index
    %c0_0 = arith.constant 0 : index
    %0 = vector.load %arg1[%c0, %c0_0] : memref<8x32xf32, #tpu.memory_space<vmem>>, vector<8x32xf32>
    %c0_1 = arith.constant 0 : index
    %c0_2 = arith.constant 0 : index
    %1 = vector.load %arg2[%c0_1, %c0_2] : memref<32x561xf32, #tpu.memory_space<vmem>>, vector<32x561xf32>
    %cst = arith.constant dense<0.000000e+00> : vector<8x561xf32>
    %2 = tpu.matmul %0, %1, %cst {dimension_numbers = #tpu.dot_dimension_numbers<[1], [0], [0], [1], [0, 0, 1, 1], [], []>} : vector<8x32xf32>, vector<32x561xf32>, vector<8x561xf32> -> vector<8x561xf32>
    %c0_3 = arith.constant 0 : index
    %c0_4 = arith.constant 0 : index
    %3 = vector.load %arg3[%c0_3, %c0_4] : memref<1x561xf32, #tpu.memory_space<vmem>>, vector<1x561xf32>
    %4 = vector.broadcast %3 : vector<1x561xf32> to vector<8x561xf32>
    %5 = arith.addf %2, %4 : vector<8x561xf32>
    %c0_5 = arith.constant 0 : index
    %c0_6 = arith.constant 0 : index
    %6 = vector.load %arg4[%c0_5, %c0_6] : memref<8x561xf32, #tpu.memory_space<vmem>>, vector<8x561xf32>
    tpu.vector_store %arg4[%c0_5, %c0_6], %5 {strides = array<i32>} : memref<8x561xf32, #tpu.memory_space<vmem>>, vector<8x561xf32>,
    return
  }
  func.func @transform_0(%arg0: i32) -> (i32, i32) {
    %c0_i32 = arith.constant 0 : i32
    %c0_i32_0 = arith.constant 0 : i32
    return %arg0, %c0_i32 : i32, i32
  }
  func.func @transform_1(%arg0: i32) -> (i32, i32) {
    %c0_i32 = arith.constant 0 : i32
    %c0_i32_0 = arith.constant 0 : i32
    %c0_i32_1 = arith.constant 0 : i32
    return %c0_i32, %c0_i32_0 : i32, i32
  }
  func.func @transform_2(%arg0: i32) -> (i32, i32) {
    %c0_i32 = arith.constant 0 : i32
    %c0_i32_0 = arith.constant 0 : i32
    %c0_i32_1 = arith.constant 0 : i32
    return %c0_i32, %c0_i32_0 : i32, i32
  }
  func.func @transform_3(%arg0: i32) -> (i32, i32) {
    %c0_i32 = arith.constant 0 : i32
    %c0_i32_0 = arith.constant 0 : i32
    return %arg0, %c0_i32 : i32, i32
  }
}

</mosaic_0001>

<llo_original>
// kernel: tpu_custom_call.1
$region0: #{tpu_custom_call.1}
  #allocation0 [shape = 'u32[]', space=smem, size = 0x4, offset = 0x4, fixed_abs, tag = 'smem constant byte address 0x4 - core index']
  #allocation1 [shape = 'u32[144,128]{1,0:T(1,128)}', space=vmem, size = 0x12000, scoped, tag = 'internal scratch']
  %s0 = inlined_call_operand.hbm [shape: f32[8,32], index: 0, kind: input, shape index: {}]
  %s1 = inlined_call_operand.hbm [shape: f32[32,561], index: 1, kind: input, shape index: {}]
  %s2 = inlined_call_operand.hbm [shape: f32[1,561], index: 2, kind: input, shape index: {}]
  %s3 = inlined_call_operand.hbm [shape: f32[8,561], index: 3, kind: output, shape index: {}]
  %s4 = sld [smem:[#allocation0]]
  $region34: #{tpu_custom_call.1} parent=0
    _
  %s6 = ssub.s32 1, %s4
  %s7 = scalar_select 0, %s6, %s4
  $region1: #{tpu_custom_call.1} parent=0
    #allocation2 [shape = 'u8[4096]{0}', space=vmem, size = 0x1000, scoped, tag = 'input window, operand 0, single buffered']
    #allocation3 [shape = 's32[1]{0}', space=sflag, size = 0x4, scoped, tag = 'scoped memory for tpu_custom_call.1']
    #allocation4 [shape = 's32[1]{0}', space=sflag, size = 0x4, scoped, tag = 'scoped memory for tpu_custom_call.1']
    #allocation5 [shape = 'u8[81920]{0}', space=vmem, size = 0x14000, scoped, tag = 'input window, operand 1, single buffered']
    #allocation6 [shape = 's32[1]{0}', space=sflag, size = 0x4, scoped, tag = 'scoped memory for tpu_custom_call.1']
    #allocation7 [shape = 'u8[2560]{0}', space=vmem, size = 0xc00, scoped, tag = 'input window, operand 2, single buffered']
    #allocation8 [shape = 'u8[20480]{0}', space=vmem, size = 0x5000, scoped, tag = 'output window, operand 0, single buffered']
    %8 = vsyncpa [#allocation3], 0
    %9 = vsyncpa [#allocation6], 0
    %10 = vsyncpa [#allocation4], 0
    // Predicated region
    $region2: #{tpu_custom_call.1} parent=1 // pred_check
      _
    $region3: #{tpu_custom_call.1} parent=1 // pred_check_branch
      %12 = sbr.rel (0) target = $region5
    $region4: #{tpu_custom_call.1} parent=1 // pred_region
      %s14 = ssub.s32 128, 128
      %15 = vsyncadd [#allocation3], %s14
      %s17 = sshll.u32 [#allocation2], 4
      %s18 = int_to_ptr.vmem [resolvable:$true] %s17
      %20 = dma.hbm_to_vmem [thread:$0]  %s0, 128, %s18, [#allocation3]
    $region5: #{tpu_custom_call.1} parent=1 // pred_fallthru
      _
    // Predicated region
    $region6: #{tpu_custom_call.1} parent=1 // pred_check
      _
    $region7: #{tpu_custom_call.1} parent=1 // pred_check_branch
      %22 = sbr.rel (0) target = $region9
    $region8: #{tpu_custom_call.1} parent=1 // pred_region
      %s24 = ssub.s32 2560, 2560
      %25 = vsyncadd [#allocation6], %s24
      %s26 = sshll.u32 [#allocation5], 4
      %s27 = int_to_ptr.vmem [resolvable:$true] %s26
      %32 = dma.hbm_to_vmem [thread:$0]  %s1, 2560, %s27, [#allocation6], 640, 640, 40
    $region9: #{tpu_custom_call.1} parent=1 // pred_fallthru
      _
    // Predicated region
    $region10: #{tpu_custom_call.1} parent=1 // pred_check
      _
    $region11: #{tpu_custom_call.1} parent=1 // pred_check_branch
      %34 = sbr.rel (0) target = $region13
    $region12: #{tpu_custom_call.1} parent=1 // pred_region
      %s36 = ssub.s32 80, 80
      %37 = vsyncadd [#allocation6], %s36
      %s39 = sshll.u32 [#allocation7], 4
      %s40 = int_to_ptr.vmem [resolvable:$true] %s39
      %42 = dma.hbm_to_vmem [thread:$0]  %s2, 80, %s40, [#allocation6]
    $region13: #{tpu_custom_call.1} parent=1 // pred_fallthru
      _
    // Predicated region
    $region14: #{tpu_custom_call.1} parent=1 // pred_check
      _
    $region15: #{tpu_custom_call.1} parent=1 // pred_check_branch
      %44 = sbr.rel (0) target = $region17
    $region16: #{tpu_custom_call.1} parent=1 // pred_region
      %45 = dma.done [#allocation3], 128
    $region17: #{tpu_custom_call.1} parent=1 // pred_fallthru
      _
    // Predicated region
    $region18: #{tpu_custom_call.1} parent=1 // pred_check
      _
    $region19: #{tpu_custom_call.1} parent=1 // pred_check_branch
      %47 = sbr.rel (0) target = $region21
    $region20: #{tpu_custom_call.1} parent=1 // pred_region
      %48 = dma.done [#allocation6], 2560
    $region21: #{tpu_custom_call.1} parent=1 // pred_fallthru
      _
    // Predicated region
    $region22: #{tpu_custom_call.1} parent=1 // pred_check
      _
    $region23: #{tpu_custom_call.1} parent=1 // pred_check_branch
      %50 = sbr.rel (0) target = $region25
    $region24: #{tpu_custom_call.1} parent=1 // pred_region
      %51 = dma.done [#allocation6], 80
    $region25: #{tpu_custom_call.1} parent=1 // pred_fallthru
      _
    %v52 = vld [vmem:[#allocation2] sm:$0xff]
    %v53 = vld [vmem:[#allocation5] sm:$0xff]
    %v54 = vld [vmem:[#allocation5 + $0x8] sm:$0xff]
    %v55 = vld [vmem:[#allocation5 + $0x10] sm:$0xff]
    %v56 = vld [vmem:[#allocation5 + $0x18] sm:$0xff]
    %v57 = vld [vmem:[#allocation5 + $0x20] sm:$0xff]
    %v58 = vld [vmem:[#allocation5 + $0x28] sm:$0xff]
    %v59 = vld [vmem:[#allocation5 + $0x30] sm:$0xff]
    %v60 = vld [vmem:[#allocation5 + $0x38] sm:$0xff]
    %v61 = vld [vmem:[#allocation5 + $0x40] sm:$0xff]
    %v62 = vld [vmem:[#allocation5 + $0x48] sm:$0xff]
    %v63 = vld [vmem:[#allocation5 + $0x50] sm:$0xff]
    %v64 = vld [vmem:[#allocation5 + $0x58] sm:$0xff]
    %v65 = vld [vmem:[#allocation5 + $0x60] sm:$0xff]
    %v66 = vld [vmem:[#allocation5 + $0x68] sm:$0xff]
    %v67 = vld [vmem:[#allocation5 + $0x70] sm:$0xff]
    %v68 = vld [vmem:[#allocation5 + $0x78] sm:$0xff]
    %v69 = vld [vmem:[#allocation5 + $0x80] sm:$0xff]
    %v70 = vld [vmem:[#allocation5 + $0x88] sm:$0xff]
    %v71 = vld [vmem:[#allocation5 + $0x90] sm:$0xff]
    %v72 = vld [vmem:[#allocation5 + $0x98] sm:$0xff]
    %v73 = vld [vmem:[#allocation7] sm:$0x1f]
    %v75 = vlaneseq
    %v76 = vshrl.u32 %v75, 7
    %v77 = vsub.s32 0, %v76
    %v78 = vrot.slane %v73, %v77
    %v79 = vlaneseq
    %v80 = vshrl.u32 %v79, 7
    %v81 = vsub.s32 1, %v80
    %v82 = vrot.slane %v73, %v81
    %v83 = vlaneseq
    %v84 = vshrl.u32 %v83, 7
    %v85 = vsub.s32 2, %v84
    %v86 = vrot.slane %v73, %v85
    %v87 = vlaneseq
    %v88 = vshrl.u32 %v87, 7
    %v89 = vsub.s32 3, %v88
    %v90 = vrot.slane %v73, %v89
    %v91 = vlaneseq
    %v92 = vshrl.u32 %v91, 7
    %v93 = vsub.s32 4, %v92
    %v94 = vrot.slane %v73, %v93
    %vm100 = vcmask 261120
    %v102 = vsel %vm100, %v52, 0
    %104 = vmatprep.subr.mxu0 0.0
    %105 = vmatpush1.msra.mxu0 0.0
    %106 = vmatprep.subr.mxu0 0.0
    %107 = vmatpush1.msra.mxu0 0.0
    %108 = vmatprep.subr.mxu0 0.0
    %109 = vmatpush1.msra.mxu0 0.0
    %110 = vmatprep.subr.mxu0 0.0
    %111 = vmatpush1.msra.mxu0 0.0
    %112 = vmatprep.subr.mxu0 0.0
    %113 = vmatpush1.msra.mxu0 0.0
    %114 = vmatprep.subr.mxu0 0.0
    %115 = vmatpush1.msra.mxu0 0.0
    %116 = vmatprep.subr.mxu0 0.0
    %117 = vmatpush1.msra.mxu0 0.0
    %118 = vmatprep.subr.mxu0 0.0
    %119 = vmatpush1.msra.mxu0 0.0
    %120 = vmatprep.subr.mxu0 0.0
    %121 = vmatpush1.msra.mxu0 0.0
    %122 = vmatprep.subr.mxu0 0.0
    %123 = vmatpush1.msra.mxu0 0.0
    %124 = vmatprep.subr.mxu0 0.0
    %125 = vmatpush1.msra.mxu0 0.0
    %126 = vmatprep.subr.mxu0 0.0
    %127 = vmatpush1.msra.mxu0 0.0
    %128 = vmatprep.subr.mxu0 %v69
    %129 = vmatpush1.msra.mxu0 %v68
    %130 = vmatprep.subr.mxu0 %v64
    %131 = vmatpush1.msra.mxu0 %v63
    %132 = vmatprep.subr.mxu0 %v59
    %133 = vmatpush1.msra.mxu0 %v58
    %134 = vmatprep.subr.mxu0 %v54
    %135 = vmatpush1.msra.mxu0 %v53
    %136 = vmatprep.subr.mxu0 0.0
    %137 = vmatpush2.msra.mxu0 0.0
    %138 = vmatprep.subr.mxu0 0.0
    %139 = vmatpush2.msra.mxu0 0.0
    %140 = vmatprep.subr.mxu0 0.0
    %141 = vmatpush2.msra.mxu0 0.0
    %142 = vmatprep.subr.mxu0 0.0
    %143 = vmatpush2.msra.mxu0 0.0
    %144 = vmatprep.subr.mxu0 0.0
    %145 = vmatpush2.msra.mxu0 0.0
    %146 = vmatprep.subr.mxu0 0.0
    %147 = vmatpush2.msra.mxu0 0.0
    %148 = vmatprep.subr.mxu0 0.0
    %149 = vmatpush2.msra.mxu0 0.0
    %150 = vmatprep.subr.mxu0 0.0
    %151 = vmatpush2.msra.mxu0 0.0
    %152 = vmatprep.subr.mxu0 0.0
    %153 = vmatpush2.msra.mxu0 0.0
    %154 = vmatprep.subr.mxu0 0.0
    %155 = vmatpush2.msra.mxu0 0.0
    %156 = vmatprep.subr.mxu0 0.0
    %157 = vmatpush2.msra.mxu0 0.0
    %158 = vmatprep.subr.mxu0 0.0
    %159 = vmatpush2.msra.mxu0 0.0
    %160 = vmatprep.subr.mxu0 0.0
    %161 = vmatpush2.msra.mxu0 0.0
    %162 = vmatprep.subr.mxu0 0.0
    %163 = vmatpush2.msra.mxu0 0.0
    %164 = vmatprep.subr.mxu0 0.0
    %165 = vmatpush2.msra.mxu0 0.0
    %166 = vmatprep.subr.mxu0 0.0
    %167 = vmatpush2.msra.mxu0 0.0
    %168 = vmatprep.mubr.f32.mxu0 0.0
    %169 = vmatmul.mubr.f32.gmra.mxu0 %v102
    %v170 = vpop.f32.mrf.mxu0
    %v171 = vadd.f32 %v78, %v170
    %v172 = vpop.f32.mrf.mxu0
    %v173 = vadd.f32 %v82, %v172
    %174 = vdwg.mxu0
    %175 = vmatprep.subr.mxu0 0.0
    %176 = vmatpush1.msra.mxu0 0.0
    %177 = vmatprep.subr.mxu0 0.0
    %178 = vmatpush1.msra.mxu0 0.0
    %179 = vmatprep.subr.mxu0 0.0
    %180 = vmatpush1.msra.mxu0 0.0
    %181 = vmatprep.subr.mxu0 0.0
    %182 = vmatpush1.msra.mxu0 0.0
    %183 = vmatprep.subr.mxu0 0.0
    %184 = vmatpush1.msra.mxu0 0.0
    %185 = vmatprep.subr.mxu0 0.0
    %186 = vmatpush1.msra.mxu0 0.0
    %187 = vmatprep.subr.mxu0 0.0
    %188 = vmatpush1.msra.mxu0 0.0
    %189 = vmatprep.subr.mxu0 0.0
    %190 = vmatpush1.msra.mxu0 0.0
    %191 = vmatprep.subr.mxu0 0.0
    %192 = vmatpush1.msra.mxu0 0.0
    %193 = vmatprep.subr.mxu0 0.0
    %194 = vmatpush1.msra.mxu0 0.0
    %195 = vmatprep.subr.mxu0 0.0
    %196 = vmatpush1.msra.mxu0 0.0
    %197 = vmatprep.subr.mxu0 0.0
    %198 = vmatpush1.msra.mxu0 0.0
    %199 = vmatprep.subr.mxu0 %v71
    %200 = vmatpush1.msra.mxu0 %v70
    %201 = vmatprep.subr.mxu0 %v66
    %202 = vmatpush1.msra.mxu0 %v65
    %203 = vmatprep.subr.mxu0 %v61
    %204 = vmatpush1.msra.mxu0 %v60
    %205 = vmatprep.subr.mxu0 %v56
    %206 = vmatpush1.msra.mxu0 %v55
    %207 = vmatprep.subr.mxu0 0.0
    %208 = vmatpush2.msra.mxu0 0.0
    %209 = vmatprep.subr.mxu0 0.0
    %210 = vmatpush2.msra.mxu0 0.0
    %211 = vmatprep.subr.mxu0 0.0
    %212 = vmatpush2.msra.mxu0 0.0
    %213 = vmatprep.subr.mxu0 0.0
    %214 = vmatpush2.msra.mxu0 0.0
    %215 = vmatprep.subr.mxu0 0.0
    %216 = vmatpush2.msra.mxu0 0.0
    %217 = vmatprep.subr.mxu0 0.0
    %218 = vmatpush2.msra.mxu0 0.0
    %219 = vmatprep.subr.mxu0 0.0
    %220 = vmatpush2.msra.mxu0 0.0
    %221 = vmatprep.subr.mxu0 0.0
    %222 = vmatpush2.msra.mxu0 0.0
    %223 = vmatprep.subr.mxu0 0.0
    %224 = vmatpush2.msra.mxu0 0.0
    %225 = vmatprep.subr.mxu0 0.0
    %226 = vmatpush2.msra.mxu0 0.0
    %227 = vmatprep.subr.mxu0 0.0
    %228 = vmatpush2.msra.mxu0 0.0
    %229 = vmatprep.subr.mxu0 0.0
    %230 = vmatpush2.msra.mxu0 0.0
    %231 = vmatprep.subr.mxu0 0.0
    %232 = vmatpush2.msra.mxu0 0.0
    %233 = vmatprep.subr.mxu0 0.0
    %234 = vmatpush2.msra.mxu0 0.0
    %235 = vmatprep.subr.mxu0 0.0
    %236 = vmatpush2.msra.mxu0 0.0
    %237 = vmatprep.subr.mxu0 0.0
    %238 = vmatpush2.msra.mxu0 0.0
    %239 = vmatprep.mubr.f32.mxu0 0.0
    %240 = vmatmul.mubr.f32.gmra.mxu0 %v102
    %v241 = vpop.f32.mrf.mxu0
    %v242 = vadd.f32 %v86, %v241
    %v243 = vpop.f32.mrf.mxu0
    %v244 = vadd.f32 %v90, %v243
    %245 = vdwg.mxu0
    %246 = vmatprep.subr.mxu0 0.0
    %247 = vmatpush1.msra.mxu0 0.0
    %248 = vmatprep.subr.mxu0 0.0
    %249 = vmatpush1.msra.mxu0 0.0
    %250 = vmatprep.subr.mxu0 0.0
    %251 = vmatpush1.msra.mxu0 0.0
    %252 = vmatprep.subr.mxu0 0.0
    %253 = vmatpush1.msra.mxu0 0.0
    %254 = vmatprep.subr.mxu0 0.0
    %255 = vmatpush1.msra.mxu0 0.0
    %256 = vmatprep.subr.mxu0 0.0
    %257 = vmatpush1.msra.mxu0 0.0
    %258 = vmatprep.subr.mxu0 0.0
    %259 = vmatpush1.msra.mxu0 0.0
    %260 = vmatprep.subr.mxu0 0.0
    %261 = vmatpush1.msra.mxu0 0.0
    %262 = vmatprep.subr.mxu0 0.0
    %263 = vmatpush1.msra.mxu0 0.0
    %264 = vmatprep.subr.mxu0 0.0
    %265 = vmatpush1.msra.mxu0 0.0
    %266 = vmatprep.subr.mxu0 0.0
    %267 = vmatpush1.msra.mxu0 0.0
    %268 = vmatprep.subr.mxu0 0.0
    %269 = vmatpush1.msra.mxu0 0.0
    %270 = vmatprep.subr.mxu0 0.0
    %271 = vmatpush1.msra.mxu0 %v72
    %272 = vmatprep.subr.mxu0 0.0
    %273 = vmatpush1.msra.mxu0 %v67
    %274 = vmatprep.subr.mxu0 0.0
    %275 = vmatpush1.msra.mxu0 %v62
    %276 = vmatprep.subr.mxu0 0.0
    %277 = vmatpush1.msra.mxu0 %v57
    %278 = vmatprep.subr.mxu0 0.0
    %279 = vmatpush2.msra.mxu0 0.0
    %280 = vmatprep.subr.mxu0 0.0
    %281 = vmatpush2.msra.mxu0 0.0
    %282 = vmatprep.subr.mxu0 0.0
    %283 = vmatpush2.msra.mxu0 0.0
    %284 = vmatprep.subr.mxu0 0.0
    %285 = vmatpush2.msra.mxu0 0.0
    %286 = vmatprep.subr.mxu0 0.0
    %287 = vmatpush2.msra.mxu0 0.0
    %288 = vmatprep.subr.mxu0 0.0
    %289 = vmatpush2.msra.mxu0 0.0
    %290 = vmatprep.subr.mxu0 0.0
    %291 = vmatpush2.msra.mxu0 0.0
    %292 = vmatprep.subr.mxu0 0.0
    %293 = vmatpush2.msra.mxu0 0.0
    %294 = vmatprep.subr.mxu0 0.0
    %295 = vmatpush2.msra.mxu0 0.0
    %296 = vmatprep.subr.mxu0 0.0
    %297 = vmatpush2.msra.mxu0 0.0
    %298 = vmatprep.subr.mxu0 0.0
    %299 = vmatpush2.msra.mxu0 0.0
    %300 = vmatprep.subr.mxu0 0.0
    %301 = vmatpush2.msra.mxu0 0.0
    %302 = vmatprep.subr.mxu0 0.0
    %303 = vmatpush2.msra.mxu0 0.0
    %304 = vmatprep.subr.mxu0 0.0
    %305 = vmatpush2.msra.mxu0 0.0
    %306 = vmatprep.subr.mxu0 0.0
    %307 = vmatpush2.msra.mxu0 0.0
    %308 = vmatprep.subr.mxu0 0.0
    %309 = vmatpush2.msra.mxu0 0.0
    %310 = vmatprep.mubr.f32.mxu0 0.0
    %311 = vmatmul.mubr.f32.gmra.mxu0 %v102
    %v312 = vpop.f32.mrf.mxu0
    %v313 = vadd.f32 %v94, %v312
    %v314 = vpop.f32.mrf.mxu0
    %315 = vdwg.mxu0
    %316 = vst [vmem:[#allocation8] sm:$0xff] %v171
    %317 = vst [vmem:[#allocation8 + $0x8] sm:$0xff] %v173
    %318 = vst [vmem:[#allocation8 + $0x10] sm:$0xff] %v242
    %319 = vst [vmem:[#allocation8 + $0x18] sm:$0xff] %v244
    %vm320 = vcmask 400384
    %321 = vst.msk [vmem:[#allocation8 + $0x20] sm:$0xff] %vm320, %v313
    // Predicated region
    $region26: #{tpu_custom_call.1} parent=1 // pred_check
      _
    $region27: #{tpu_custom_call.1} parent=1 // pred_check_branch
      %323 = sbr.rel (0) target = $region29
    $region28: #{tpu_custom_call.1} parent=1 // pred_region
      %s325 = ssub.s32 640, 640
      %326 = vsyncadd [#allocation4], %s325
      %s328 = sshll.u32 [#allocation8], 4
      %s329 = int_to_ptr.vmem [resolvable:$true] %s328
      %331 = dma.vmem_to_hbm [thread:$0]  %s329, 640, %s3, [#allocation4]
    $region29: #{tpu_custom_call.1} parent=1 // pred_fallthru
      _
    // Predicated region
    $region30: #{tpu_custom_call.1} parent=1 // pred_check
      _
    $region31: #{tpu_custom_call.1} parent=1 // pred_check_branch
      %333 = sbr.rel (0) target = $region33
    $region32: #{tpu_custom_call.1} parent=1 // pred_region
      %334 = dma.done [#allocation4], 640
    $region33: #{tpu_custom_call.1} parent=1 // pred_fallthru
      _
    %335 = vsyncpa [#allocation3], 1
    %336 = vsyncpa [#allocation6], 1
    %337 = vsyncpa [#allocation4], 1

</llo_original>
